<compile_context>
chip_gen: v6e
topology: v6e:2x2x1
jax: 0.10.0
libtpu: 0.0.40
codegen_flags: <defaults>
</compile_context>

<pallas_src>
import functools

import jax
import jax.numpy as jnp
from jax.experimental import pallas as pl
from jax.experimental.pallas import tpu as pltpu


def dense_kernel(x_ref, w_ref, b_ref, o_ref):
    """One (tm, tn) f32 output tile of relu(x @ w + b), accumulated over K.

    x_ref: (tm, tk) bf16  activation tile
    w_ref: (tk, tn) bf16  weight tile, [in, out] layout (standard contraction)
    b_ref: (1, tn)  f32   bias tile
    o_ref: (tm, tn) f32   output tile; doubles as the K accumulator because the
                          output block index is constant along the K grid axis
    """
    k = pl.program_id(2)

    @pl.when(k == 0)
    def _init():
        o_ref[...] = jnp.zeros_like(o_ref)

    # bf16 operands, f32 accumulation on the MXU.
    o_ref[...] += jnp.dot(x_ref[...], w_ref[...], preferred_element_type=jnp.float32)

    @pl.when(k == pl.num_programs(2) - 1)
    def _finalize():
        o_ref[...] = jnp.maximum(o_ref[...] + b_ref[...], 0.0)   # bias + ReLU


def _cdiv(a, b):
    return -(-a // b)


def _round_up(a, b):
    return _cdiv(a, b) * b


def _pick_tile(dim, max_tile, align):
    """Largest `align`-multiple tile <= max_tile splitting `dim` into
    near-equal blocks (minimizes padded-tile waste vs. a fixed tile size)."""
    dim_p = _round_up(dim, align)
    n_blocks = _cdiv(dim_p, max_tile)
    return _round_up(_cdiv(dim_p, n_blocks), align)


def prepare_dense_params(weight, bias):
    """One-time parameter prep (do once at load time, NOT per forward call):
       - transpose PyTorch [out_features, in_features] -> [in, out] so the
         kernel uses a standard (no-transpose) MXU contraction,
       - cast the weight to bfloat16 (f32 accumulation happens in-kernel).
    """
    # TODO(synk): on v7x an fp8 weight variant would double MXU throughput again
    # (v7x MXU supports fp8 but not int8/int4); keep int8 paths to v5e/v6e only.
    w_kn = jnp.asarray(weight, jnp.float32).T.astype(jnp.bfloat16)
    b = jnp.asarray(bias, jnp.float32)
    return w_kn, b


@functools.partial(jax.jit, static_argnames=("tm_max", "tn_max", "tk_max"))
def dense_forward(x, w_kn, bias, *, tm_max=512, tn_max=512, tk_max=1024):
    """relu(x @ w_kn + bias) == PyTorch Dense forward (nn.Linear + ReLU).

    x:    [M, K] float32 activations
    w_kn: [K, N] bfloat16 prepared weight (see prepare_dense_params)
    bias: [N]    float32
    returns [M, N] float32
    """
    M, K = x.shape
    K2, N = w_kn.shape
    assert K == K2, "in_features mismatch"
    assert bias.shape == (N,)

    # ---- tile selection ----------------------------------------------------
    # rows multiple of 8 (sublanes), lane dims multiple of 128 (vreg / MXU);
    # near-equal blocks per axis to minimize padded-tile MXU waste.
    tm = _pick_tile(M, tm_max, 8)
    tn = _pick_tile(N, tn_max, 128)
    tk = _pick_tile(K, tk_max, 128)

    Mp = _round_up(M, tm)
    Np = _round_up(N, tn)

    # v7x has two TensorCores: ensure the parallel (M, N) grid has >= 2 blocks
    # whenever N is large enough so both cores get sharded work.
    if (Mp // tm) * (Np // tn) < 2 and Np >= 256:
        tn = _round_up(Np // 2, 128)
        Np = _round_up(N, tn)

    Kp = _round_up(K, tk)

    # ---- padding + dtype ---------------------------------------------------
    # Zero padding is exact: padded K columns contribute 0 to the dot product,
    # padded M rows / N columns are sliced off at the end.
    # TODO(synk): for unaligned K/N in a serving setting, cache the padded bf16
    # weight across calls instead of re-padding on every forward.
    x_p = x if (Mp == M and Kp == K) else jnp.pad(x, ((0, Mp - M), (0, Kp - K)))
    x_p = x_p.astype(jnp.bfloat16)
    w_p = w_kn if (Kp == K and Np == N) else jnp.pad(w_kn, ((0, Kp - K), (0, Np - N)))
    b_p = bias if Np == N else jnp.pad(bias, (0, Np - N))
    b2d = b_p.reshape(1, Np).astype(jnp.float32)

    grid = (Mp // tm, Np // tn, Kp // tk)

    cost = pl.CostEstimate(
        flops=2 * M * N * K,
        transcendentals=0,
        bytes_accessed=2 * (M * K + K * N) + 4 * (M * N + N),
    )

    out = pl.pallas_call(
        dense_kernel,
        out_shape=jax.ShapeDtypeStruct((Mp, Np), jnp.float32),
        grid_spec=pltpu.PrefetchScalarGridSpec(
            num_scalar_prefetch=0,
            grid=grid,
            in_specs=[
                pl.BlockSpec((tm, tk), lambda i, j, k: (i, k)),   # x tile (bf16)
                # TODO(synk): on v5e (lowest HBM BW) consider
                # pipeline_mode=pl.Buffered(3) here if weight DMA shows exposed.
                pl.BlockSpec((tk, tn), lambda i, j, k: (k, j)),   # weight tile (bf16)
                pl.BlockSpec((1, tn), lambda i, j, k: (0, j)),    # bias tile (f32)
            ],
            out_specs=pl.BlockSpec((tm, tn), lambda i, j, k: (i, j)),
        ),
        compiler_params=pltpu.CompilerParams(
            dimension_semantics=("parallel", "parallel", "arbitrary"),
        ),
        cost_estimate=cost,
    )(x_p, w_p, b2d)

    if Mp != M or Np != N:
        out = out[:M, :N]
    return out


def init_dense_params(key, in_features, out_features):
    """Deterministic init mimicking the PyTorch module:
       - weight: kaiming_normal_ (he_normal), std = sqrt(2 / fan_in)
       - bias:   nn.Linear default, U(-1/sqrt(fan_in), 1/sqrt(fan_in))
    """
    kw, kb = jax.random.split(key)
    std = jnp.sqrt(2.0 / in_features)
    weight = std * jax.random.normal(kw, (out_features, in_features), jnp.float32)
    bound = 1.0 / jnp.sqrt(in_features)
    bias = jax.random.uniform(kb, (out_features,), jnp.float32, -bound, bound)
    return weight, bias


def _reference(x, weight_nk, bias):
    """Plain-JAX reference with the same bf16 operand rounding (f32 accum)."""
    xb = x.astype(jnp.bfloat16).astype(jnp.float32)
    wb = weight_nk.astype(jnp.bfloat16).astype(jnp.float32)
    return jnp.maximum(xb @ wb.T + bias, 0.0)


if __name__ == "__main__":
    key = jax.random.PRNGKey(0)
    k_x, k_p = jax.random.split(key)

    # Small shapes consistent with the module (batch=16, in=32, out=64).
    M, in_features, out_features = 16, 32, 64
    x = jax.random.normal(k_x, (M, in_features), jnp.float32)
    weight, bias = init_dense_params(k_p, in_features, out_features)
    w_kn, b = prepare_dense_params(weight, bias)        # one-time weight prep

    out = jax.block_until_ready(dense_forward(x, w_kn, b))
    ref = _reference(x, weight, bias)
    assert out.shape == (M, out_features)
    assert jnp.allclose(out, ref, atol=1e-2, rtol=1e-2), "mismatch vs reference"

    # Larger, non-tile-aligned shapes: exercises padding, a multi-block parallel
    # (M, N) grid (both v7x cores) and multi-step K accumulation into o_ref.
    M2, K2, N2 = 300, 1300, 520
    x2 = jax.random.normal(jax.random.PRNGKey(1), (M2, K2), jnp.float32)
    w2, b2 = init_dense_params(jax.random.PRNGKey(2), K2, N2)
    w2_kn, b2f = prepare_dense_params(w2, b2)
    out2 = jax.block_until_ready(dense_forward(x2, w2_kn, b2f))
    ref2 = _reference(x2, w2, b2)
    assert out2.shape == (M2, N2)
    assert jnp.allclose(out2, ref2, atol=5e-2, rtol=5e-2), "mismatch vs reference (padded case)"

    print("KERNEL_OK")
</pallas_src>

<mosaic_0001>
module attributes {stable_mosaic.version = 11 : i64} {
  func.func @dense_kernel(%arg0: i32, %arg1: i32, %arg2: i32, %arg3: memref<16x128xbf16, #tpu.memory_space<vmem>>, %arg4: memref<128x128xbf16, #tpu.memory_space<vmem>>, %arg5: memref<1x128xf32, #tpu.memory_space<vmem>>, %arg6: memref<16x128xf32, #tpu.memory_space<vmem>>) attributes {dimension_semantics = [#tpu.dimension_semantics<parallel>, #tpu.dimension_semantics<parallel>, #tpu.dimension_semantics<arbitrary>], iteration_bounds = array<i64: 1, 1, 1>, scalar_prefetch = 0 : i64, scratch_operands = 0 : i64, tpu.core_type = #tpu.core_type<tc>, window_params = [{transform_indices = @transform_0, window_bounds = array<i64: 16, 128>}, {transform_indices = @transform_1, window_bounds = array<i64: 128, 128>}, {transform_indices = @transform_2, window_bounds = array<i64: 1, 128>}, {transform_indices = @transform_3, window_bounds = array<i64: 16, 128>}]} {
    %c0_i32 = arith.constant 0 : i32
    %0 = arith.cmpi eq, %arg2, %c0_i32 : i32
    %1 = arith.extui %0 : i1 to i32
    %c0_i32_0 = arith.constant 0 : i32
    %2 = arith.cmpi ne, %1, %c0_i32_0 : i32
    scf.if %2 {
      %cst_10 = arith.constant 0.000000e+00 : f32
      %12 = vector.broadcast %cst_10 : f32 to vector<16x128xf32>
      %c0_11 = arith.constant 0 : index
      %c0_12 = arith.constant 0 : index
      %13 = vector.load %arg6[%c0_11, %c0_12] : memref<16x128xf32, #tpu.memory_space<vmem>>, vector<16x128xf32>
      tpu.vector_store %arg6[%c0_11, %c0_12], %12 {strides = array<i32>} : memref<16x128xf32, #tpu.memory_space<vmem>>, vector<16x128xf32>,
    } else {
    }
    %c0 = arith.constant 0 : index
    %c0_1 = arith.constant 0 : index
    %3 = vector.load %arg6[%c0, %c0_1] : memref<16x128xf32, #tpu.memory_space<vmem>>, vector<16x128xf32>
    %c0_2 = arith.constant 0 : index
    %c0_3 = arith.constant 0 : index
    %4 = vector.load %arg3[%c0_2, %c0_3] : memref<16x128xbf16, #tpu.memory_space<vmem>>, vector<16x128xbf16>
    %c0_4 = arith.constant 0 : index
    %c0_5 = arith.constant 0 : index
    %5 = vector.load %arg4[%c0_4, %c0_5] : memref<128x128xbf16, #tpu.memory_space<vmem>>, vector<128x128xbf16>
    %cst = arith.constant dense<0.000000e+00> : vector<16x128xf32>
    %6 = tpu.matmul %4, %5, %cst {dimension_numbers = #tpu.dot_dimension_numbers<[1], [0], [0], [1], [0, 0, 1, 1], [], []>} : vector<16x128xbf16>, vector<128x128xbf16>, vector<16x128xf32> -> vector<16x128xf32>
    %7 = arith.addf %3, %6 : vector<16x128xf32>
    %c0_6 = arith.constant 0 : index
    %c0_7 = arith.constant 0 : index
    %8 = vector.load %arg6[%c0_6, %c0_7] : memref<16x128xf32, #tpu.memory_space<vmem>>, vector<16x128xf32>
    tpu.vector_store %arg6[%c0_6, %c0_7], %7 {strides = array<i32>} : memref<16x128xf32, #tpu.memory_space<vmem>>, vector<16x128xf32>,
    %c0_i32_8 = arith.constant 0 : i32
    %9 = arith.cmpi eq, %arg2, %c0_i32_8 : i32
    %10 = arith.extui %9 : i1 to i32
    %c0_i32_9 = arith.constant 0 : i32
    %11 = arith.cmpi ne, %10, %c0_i32_9 : i32
    scf.if %11 {
      %c0_10 = arith.constant 0 : index
      %c0_11 = arith.constant 0 : index
      %12 = vector.load %arg6[%c0_10, %c0_11] : memref<16x128xf32, #tpu.memory_space<vmem>>, vector<16x128xf32>
      %c0_12 = arith.constant 0 : index
      %c0_13 = arith.constant 0 : index
      %13 = vector.load %arg5[%c0_12, %c0_13] : memref<1x128xf32, #tpu.memory_space<vmem>>, vector<1x128xf32>
      %14 = vector.broadcast %13 : vector<1x128xf32> to vector<16x128xf32>
      %15 = arith.addf %12, %14 : vector<16x128xf32>
      %cst_14 = arith.constant 0.000000e+00 : f32
      %16 = vector.broadcast %cst_14 : f32 to vector<16x128xf32>
      %17 = arith.maximumf %15, %16 : vector<16x128xf32>
      %c0_15 = arith.constant 0 : index
      %c0_16 = arith.constant 0 : index
      %18 = vector.load %arg6[%c0_15, %c0_16] : memref<16x128xf32, #tpu.memory_space<vmem>>, vector<16x128xf32>
      tpu.vector_store %arg6[%c0_15, %c0_16], %17 {strides = array<i32>} : memref<16x128xf32, #tpu.memory_space<vmem>>, vector<16x128xf32>,
    } else {
    }
    return
  }
  func.func @transform_0(%arg0: i32, %arg1: i32, %arg2: i32) -> (i32, i32) {
    %c0_i32 = arith.constant 0 : i32
    return %arg0, %arg2 : i32, i32
  }
  func.func @transform_1(%arg0: i32, %arg1: i32, %arg2: i32) -> (i32, i32) {
    %c0_i32 = arith.constant 0 : i32
    return %arg2, %arg1 : i32, i32
  }
  func.func @transform_2(%arg0: i32, %arg1: i32, %arg2: i32) -> (i32, i32) {
    %c0_i32 = arith.constant 0 : i32
    %c0_i32_0 = arith.constant 0 : i32
    return %c0_i32, %arg1 : i32, i32
  }
  func.func @transform_3(%arg0: i32, %arg1: i32, %arg2: i32) -> (i32, i32) {
    %c0_i32 = arith.constant 0 : i32
    return %arg0, %arg1 : i32, i32
  }
}

</mosaic_0001>

<llo_original>
// kernel: dense_forward.1
$region0: #{dense_forward.1}
  #allocation0 [shape = 'u32[]', space=smem, size = 0x4, offset = 0x4, fixed_abs, tag = 'smem constant byte address 0x4 - core index']
  #allocation1 [shape = 'u32[144,128]{1,0:T(1,128)}', space=vmem, size = 0x12000, scoped, tag = 'internal scratch']
  %s0 = inlined_call_operand.vmem [shape: bf16[16,128], index: 0, kind: input, shape index: {}]
  %s1 = inlined_call_operand.vmem [shape: bf16[128,128], index: 1, kind: input, shape index: {}]
  %s2 = inlined_call_operand.vmem [shape: f32[1,128], index: 2, kind: input, shape index: {}]
  %s3 = inlined_call_operand.hbm [shape: f32[16,128], index: 3, kind: output, shape index: {}]
  %s4 = sld [smem:[#allocation0]]
  $region30: #{dense_forward.1} parent=0
    _
  %s6 = ssub.s32 1, %s4
  %s7 = scalar_select 0, %s6, %s4
  $region1: #{dense_forward.1} parent=0
    #allocation2 [shape = 'u8[8192]{0}', space=vmem, size = 0x2000, scoped, tag = 'output window, operand 0, single buffered']
    #allocation3 [shape = 's32[1]{0}', space=sflag, size = 0x4, scoped, tag = 'scoped memory for dense_forward.1']
    %8 = vsyncpa [#allocation3], 0
    // Predicated region
    $region2: #{dense_forward.1} parent=1 // pred_check
      _
    $region3: #{dense_forward.1} parent=1 // pred_check_branch
      %10 = sbr.rel (0) target = $region5
    $region4: #{dense_forward.1} parent=1 // pred_region
      _
    $region5: #{dense_forward.1} parent=1 // pred_fallthru
      _
    // Predicated region
    $region6: #{dense_forward.1} parent=1 // pred_check
      _
    $region7: #{dense_forward.1} parent=1 // pred_check_branch
      %12 = sbr.rel (0) target = $region9
    $region8: #{dense_forward.1} parent=1 // pred_region
      _
    $region9: #{dense_forward.1} parent=1 // pred_fallthru
      _
    // Predicated region
    $region10: #{dense_forward.1} parent=1 // pred_check
      _
    $region11: #{dense_forward.1} parent=1 // pred_check_branch
      %14 = sbr.rel (0) target = $region13
    $region12: #{dense_forward.1} parent=1 // pred_region
      _
    $region13: #{dense_forward.1} parent=1 // pred_fallthru
      _
    %p16 = scmp.eq.s32.totalorder 0, 0
    // Predicated region
    $region14: #{dense_forward.1} parent=1 // pred_check
      %p17 = pneg %p16
    $region15: #{dense_forward.1} parent=1 // pred_check_branch
      %19 = sbr.rel (%p17) target = $region17
    $region16: #{dense_forward.1} parent=1 // pred_region
      %20 = vst [vmem:[#allocation2] sm:$0xff] 0.0
      %21 = vst [vmem:[#allocation2 + $0x8] sm:$0xff] 0.0
    $region17: #{dense_forward.1} parent=1 // pred_fallthru
      _
    %v22 = vld [vmem:[#allocation2] sm:$0xff]
    %v23 = vld [vmem:[#allocation2 + $0x8] sm:$0xff]
    %v24 = vld [vmem:[%s0] sm:$0xf]
    %v25 = vld [vmem:[%s0 + $0x4] sm:$0xf]
    %v26 = vld [vmem:[%s1] sm:$0xf]
    %v27 = vld [vmem:[%s1 + $0x4] sm:$0xf]
    %v28 = vld [vmem:[%s1 + $0x8] sm:$0xf]
    %v29 = vld [vmem:[%s1 + $0xc] sm:$0xf]
    %v30 = vld [vmem:[%s1 + $0x10] sm:$0xf]
    %v31 = vld [vmem:[%s1 + $0x14] sm:$0xf]
    %v32 = vld [vmem:[%s1 + $0x18] sm:$0xf]
    %v33 = vld [vmem:[%s1 + $0x1c] sm:$0xf]
    %v34 = vld [vmem:[%s1 + $0x20] sm:$0xf]
    %v35 = vld [vmem:[%s1 + $0x24] sm:$0xf]
    %v36 = vld [vmem:[%s1 + $0x28] sm:$0xf]
    %v37 = vld [vmem:[%s1 + $0x2c] sm:$0xf]
    %v38 = vld [vmem:[%s1 + $0x30] sm:$0xf]
    %v39 = vld [vmem:[%s1 + $0x34] sm:$0xf]
    %v40 = vld [vmem:[%s1 + $0x38] sm:$0xf]
    %v41 = vld [vmem:[%s1 + $0x3c] sm:$0xf]
    %v44 = vunpack.c.l.b16 %v24
    %v45 = vunpack.c.l.b16 %v25
    %v46 = vpack.c.b16 %v45, %v44
    %v64 = vunpack.c.l.b16 %v26
    %v65 = vunpack.c.l.b16 %v27
    %v66 = vunpack.c.l.b16 %v28
    %v67 = vunpack.c.l.b16 %v29
    %v68 = vunpack.c.l.b16 %v30
    %v69 = vunpack.c.l.b16 %v31
    %v70 = vunpack.c.l.b16 %v32
    %v71 = vunpack.c.l.b16 %v33
    %v72 = vunpack.c.l.b16 %v34
    %v73 = vunpack.c.l.b16 %v35
    %v74 = vunpack.c.l.b16 %v36
    %v75 = vunpack.c.l.b16 %v37
    %v76 = vunpack.c.l.b16 %v38
    %v77 = vunpack.c.l.b16 %v39
    %v78 = vunpack.c.l.b16 %v40
    %v79 = vunpack.c.l.b16 %v41
    %v80 = vpack.c.b16 %v65, %v64
    %v81 = vpack.c.b16 %v67, %v66
    %v82 = vpack.c.b16 %v69, %v68
    %v83 = vpack.c.b16 %v71, %v70
    %v84 = vpack.c.b16 %v73, %v72
    %v85 = vpack.c.b16 %v75, %v74
    %v86 = vpack.c.b16 %v77, %v76
    %v87 = vpack.c.b16 %v79, %v78
    %96 = vmatprep.subr.bf16.mxu0 0
    %97 = vmatpush1.bf16.msra.mxu0 %v87
    %98 = vmatprep.subr.bf16.mxu0 0
    %99 = vmatpush1.bf16.msra.mxu0 %v86
    %100 = vmatprep.subr.bf16.mxu0 0
    %101 = vmatpush1.bf16.msra.mxu0 %v85
    %102 = vmatprep.subr.bf16.mxu0 0
    %103 = vmatpush1.bf16.msra.mxu0 %v84
    %104 = vmatprep.subr.bf16.mxu0 0
    %105 = vmatpush1.bf16.msra.mxu0 %v83
    %106 = vmatprep.subr.bf16.mxu0 0
    %107 = vmatpush1.bf16.msra.mxu0 %v82
    %108 = vmatprep.subr.bf16.mxu0 0
    %109 = vmatpush1.bf16.msra.mxu0 %v81
    %110 = vmatprep.subr.bf16.mxu0 0
    %111 = vmatpush1.bf16.msra.mxu0 %v80
    %112 = vmatprep.subr.bf16.mxu0 0
    %113 = vmatpush2.bf16.msra.mxu0 0
    %114 = vmatprep.subr.bf16.mxu0 0
    %115 = vmatpush2.bf16.msra.mxu0 0
    %116 = vmatprep.subr.bf16.mxu0 0
    %117 = vmatpush2.bf16.msra.mxu0 0
    %118 = vmatprep.subr.bf16.mxu0 0
    %119 = vmatpush2.bf16.msra.mxu0 0
    %120 = vmatprep.subr.bf16.mxu0 0
    %121 = vmatpush2.bf16.msra.mxu0 0
    %122 = vmatprep.subr.bf16.mxu0 0
    %123 = vmatpush2.bf16.msra.mxu0 0
    %124 = vmatprep.subr.bf16.mxu0 0
    %125 = vmatpush2.bf16.msra.mxu0 0
    %126 = vmatprep.subr.bf16.mxu0 0
    %127 = vmatpush2.bf16.msra.mxu0 0
    %128 = vmatprep.mubr.bf16.mxu0 0
    %129 = vmatmul.mubr.bf16.gmra.mxu0 %v46
    %v130 = vpop.f32.mrf.mxu0
    %v131 = vadd.f32 0.0, %v130
    %v132 = vpop.f32.mrf.mxu0
    %v133 = vpop.f32.mrf.mxu0
    %v134 = vadd.f32 0.0, %v133
    %v135 = vpop.f32.mrf.mxu0
    %136 = vdwg.mxu0
    %v137 = vadd.f32 %v22, %v131
    %v138 = vadd.f32 %v23, %v134
    %139 = vst [vmem:[#allocation2] sm:$0xff] %v137
    %140 = vst [vmem:[#allocation2 + $0x8] sm:$0xff] %v138
    // Predicated region
    $region18: #{dense_forward.1} parent=1 // pred_check
      %p141 = pneg %p16
    $region19: #{dense_forward.1} parent=1 // pred_check_branch
      %143 = sbr.rel (%p141) target = $region21
    $region20: #{dense_forward.1} parent=1 // pred_region
      %v144 = vld [vmem:[#allocation2] sm:$0xff]
      %v145 = vld [vmem:[#allocation2 + $0x8] sm:$0xff]
      %v146 = vld [vmem:[%s2] sm:$0x1]
      %v148 = vlaneseq
      %v149 = vshrl.u32 %v148, 7
      %v150 = vsub.s32 0, %v149
      %v151 = vrot.slane %v146, %v150
      %v153 = vadd.f32 %v144, %v151
      %v154 = vadd.f32 %v145, %v151
      %v155 = vmax.f32 %v153, 0.0
      %v156 = vmax.f32 %v154, 0.0
      %157 = vst [vmem:[#allocation2] sm:$0xff] %v155
      %158 = vst [vmem:[#allocation2 + $0x8] sm:$0xff] %v156
    $region21: #{dense_forward.1} parent=1 // pred_fallthru
      _
    // Predicated region
    $region22: #{dense_forward.1} parent=1 // pred_check
      _
    $region23: #{dense_forward.1} parent=1 // pred_check_branch
      %160 = sbr.rel (0) target = $region25
    $region24: #{dense_forward.1} parent=1 // pred_region
      %s162 = ssub.s32 256, 256
      %163 = vsyncadd [#allocation3], %s162
      %s164 = sshll.u32 [#allocation2], 4
      %s165 = int_to_ptr.vmem [resolvable:$true] %s164
      %170 = dma.vmem_to_hbm [thread:$0]  %s165, 256, %s3, [#allocation3], 128, 128, 8
    $region25: #{dense_forward.1} parent=1 // pred_fallthru
      _
    // Predicated region
    $region26: #{dense_forward.1} parent=1 // pred_check
      _
    $region27: #{dense_forward.1} parent=1 // pred_check_branch
      %172 = sbr.rel (0) target = $region29
    $region28: #{dense_forward.1} parent=1 // pred_region
      %173 = dma.done [#allocation3], 256
    $region29: #{dense_forward.1} parent=1 // pred_fallthru
      _
    %174 = vsyncpa [#allocation3], 1

</llo_original>
